<compile_context>
chip_gen: v5e
topology: v5e:2x2
jax: 0.10.0
libtpu: 0.0.40
codegen_flags: <defaults>
</compile_context>

<pallas_src>
import functools

import jax
import jax.numpy as jnp
from jax.experimental import pallas as pl
from jax.experimental.pallas import tpu as pltpu


# Below this total working-set size a single grid step is fastest (per-step
# overhead ~0.35 us dominates a sub-microsecond memory-bound matmul).
_SINGLE_BLOCK_BYTES = 4 * 1024 * 1024
# Per-step VMEM working-set budget used when tiling (fits the default scoped
# VMEM limit on v5e/v6e/v7x with headroom for double buffering).
_VMEM_TILE_BUDGET = 24 * 1024 * 1024


def _round_up(x, m):
    return ((x + m - 1) // m) * m


def _pick_tn(n_pad, feat_len, p_pad):
    """Pick the persons-axis tile size (static, trace-time)."""
    whole = n_pad * feat_len * 2 + p_pad * feat_len * 2 + n_pad * p_pad * 4
    if whole <= _SINGLE_BLOCK_BYTES:
        # Tiny problem: one grid step, lane-dense (p_pad-wide) output stores.
        return p_pad

    # Large table: keep >=2 grid steps (parallel -> shards across v7x's 2 TCs)
    # while the double-buffered per-step working set stays under budget.
    def fits(t):
        per_step = (n_pad * feat_len * 2          # resident features (bf16)
                    + 2 * t * feat_len * 2        # double-buffered lut tile (bf16)
                    + 2 * n_pad * t * 4)          # double-buffered out tile (f32)
        return per_step <= _VMEM_TILE_BUDGET

    tn = (p_pad // 2 // 128) * 128
    while tn > 128 and (p_pad % tn != 0 or not fits(tn)):
        tn -= 128
    return max(tn, 128)


def _labeled_matching_kernel(f_ref, lut_ref, o_ref):
    # f_ref:   (n_pad, feat_len)  bf16  -- all features, resident every step
    # lut_ref: (tn, feat_len)     bf16  -- one persons tile of the lookup table
    # o_ref:   (n_pad, tn)        f32   -- matching scores tile
    # scores_tile = features @ lut_tile.T   (contract feat_len on the MXU, f32 acc)
    o_ref[...] = jax.lax.dot_general(
        f_ref[...],
        lut_ref[...],
        dimension_numbers=(((1,), (1,)), ((), ())),
        preferred_element_type=jnp.float32,
    )


@jax.jit
def labeled_matching_forward(features, pid_labels, lookup_table):
    """Pallas implementation of LabeledMatchingLayer.forward.

    Args:
        features: [N, feat_len] float32 proposal features.
        pid_labels: [N] int32 person ids (unused in forward; interface parity).
        lookup_table: [num_persons, feat_len] float32 buffer.

    Returns:
        scores: [N, num_persons] float32 similarities.
    """
    del pid_labels  # only used by the backward-pass buffer update
    n, feat_len = features.shape
    num_persons, feat_len2 = lookup_table.shape
    assert feat_len == feat_len2

    # Pad to TPU-friendly shapes; bf16 operands feed the MXU datapath directly
    # and halve HBM traffic on the lookup table (accumulation stays f32).
    n_pad = _round_up(n, 8)            # sublane alignment of the output rows
    p_pad = _round_up(num_persons, 128)  # lane alignment of the output columns
    f = features.astype(jnp.bfloat16)
    lut = lookup_table.astype(jnp.bfloat16)
    if n_pad != n:
        f = jnp.pad(f, ((0, n_pad - n), (0, 0)))
    if p_pad != num_persons:
        lut = jnp.pad(lut, ((0, p_pad - num_persons), (0, 0)))

    tn = _pick_tn(n_pad, feat_len, p_pad)
    grid = (p_pad // tn,)

    feat_bytes = n_pad * feat_len * 2
    lut_bytes = p_pad * feat_len * 2
    out_bytes = n_pad * p_pad * 4
    cost = pl.CostEstimate(
        flops=2 * n_pad * feat_len * p_pad,
        transcendentals=0,
        bytes_accessed=feat_bytes + lut_bytes + out_bytes,
    )

    # Per-step working set (features resident + double-buffered lut/out tiles);
    # stay well under v7x's 64 MiB physical VMEM.
    working = feat_bytes + 2 * (tn * feat_len * 2 + n_pad * tn * 4)
    vmem_limit = min(max(working + (1 << 20), 32 * 1024 * 1024),
                     60 * 1024 * 1024)

    scores = pl.pallas_call(
        _labeled_matching_kernel,
        out_shape=jax.ShapeDtypeStruct((n_pad, p_pad), jnp.float32),
        grid_spec=pltpu.PrefetchScalarGridSpec(
            num_scalar_prefetch=0,
            grid=grid,
            in_specs=[
                pl.BlockSpec((n_pad, feat_len), lambda j: (0, 0)),  # features
                pl.BlockSpec((tn, feat_len), lambda j: (j, 0)),     # lut tile
            ],
            out_specs=pl.BlockSpec((n_pad, tn), lambda j: (0, j)),  # scores tile
        ),
        compiler_params=pltpu.CompilerParams(
            dimension_semantics=("parallel",),  # persons axis: megacore-shardable
            vmem_limit_bytes=vmem_limit,
        ),
        cost_estimate=cost,
    )(f, lut)

    return scores[:n, :num_persons]


class LabeledMatchingLayer:
    """JAX/Pallas port of the OIM labeled matching layer (forward only)."""

    def __init__(self, num_persons=512, feat_len=128, key=None):
        # The PyTorch module registers a zeros buffer; fill it with
        # deterministic random values here so the kernel output is non-trivial.
        if key is None:
            key = jax.random.PRNGKey(0)
        self.lookup_table = jax.random.normal(
            key, (num_persons, feat_len), dtype=jnp.float32
        )
        # TODO(synk): backward-pass momentum update of lookup_table (in-place
        # buffer mutation keyed on pid_labels >= 0) is training-only and not
        # implemented.

    def __call__(self, features, pid_labels):
        return labeled_matching_forward(features, pid_labels, self.lookup_table)


if __name__ == "__main__":
    key = jax.random.PRNGKey(0)
    k_feat, k_lut, k_lab = jax.random.split(key, 3)

    N = 16             # number of proposals (callers should batch across images)
    FEAT_LEN = 128     # feature length
    NUM_PERSONS = 512  # number of labeled persons

    features = jax.random.normal(k_feat, (N, FEAT_LEN), dtype=jnp.float32)
    pid_labels = jax.random.randint(k_lab, (N,), -1, NUM_PERSONS, dtype=jnp.int32)

    layer = LabeledMatchingLayer(num_persons=NUM_PERSONS, feat_len=FEAT_LEN, key=k_lut)

    scores = layer(features, pid_labels)
    scores = jax.block_until_ready(scores)
    assert scores.shape == (N, NUM_PERSONS)
    assert scores.dtype == jnp.float32

    # Tight check vs. a bf16-operand / f32-accumulate reference (same math).
    ref_bf16 = jax.lax.dot_general(
        features.astype(jnp.bfloat16),
        layer.lookup_table.astype(jnp.bfloat16),
        dimension_numbers=(((1,), (1,)), ((), ())),
        preferred_element_type=jnp.float32,
    )
    assert jnp.allclose(scores, ref_bf16, atol=1e-2, rtol=1e-3)

    # Loose sanity check vs. the full-f32 PyTorch-equivalent reference
    # (tolerance reflects bf16 operand rounding).
    ref_f32 = features @ layer.lookup_table.T
    assert jnp.allclose(scores, ref_f32, atol=0.2, rtol=5e-2)

    print("KERNEL_OK")
</pallas_src>

<mosaic_0001>
module attributes {stable_mosaic.version = 11 : i64} {
  func.func @_labeled_matching_kernel(%arg0: i32, %arg1: memref<16x128xbf16, #tpu.memory_space<vmem>>, %arg2: memref<512x128xbf16, #tpu.memory_space<vmem>>, %arg3: memref<16x512xf32, #tpu.memory_space<vmem>>) attributes {dimension_semantics = [#tpu.dimension_semantics<parallel>], iteration_bounds = array<i64: 1>, scalar_prefetch = 0 : i64, scratch_operands = 0 : i64, tpu.core_type = #tpu.core_type<tc>, window_params = [{pipeline_mode = #tpu.pipeline_mode<synchronous>, transform_indices = @transform_0, window_bounds = array<i64: 16, 128>}, {transform_indices = @transform_1, window_bounds = array<i64: 512, 128>}, {transform_indices = @transform_2, window_bounds = array<i64: 16, 512>}]} {
    %c0 = arith.constant 0 : index
    %c0_0 = arith.constant 0 : index
    %0 = vector.load %arg1[%c0, %c0_0] : memref<16x128xbf16, #tpu.memory_space<vmem>>, vector<16x128xbf16>
    %c0_1 = arith.constant 0 : index
    %c0_2 = arith.constant 0 : index
    %1 = vector.load %arg2[%c0_1, %c0_2] : memref<512x128xbf16, #tpu.memory_space<vmem>>, vector<512x128xbf16>
    %cst = arith.constant dense<0.000000e+00> : vector<16x512xf32>
    %2 = tpu.matmul %0, %1, %cst {dimension_numbers = #tpu.dot_dimension_numbers<[1], [1], [0], [0], [0, 0, 1, 0], [], []>} : vector<16x128xbf16>, vector<512x128xbf16>, vector<16x512xf32> -> vector<16x512xf32>
    %c0_3 = arith.constant 0 : index
    %c0_4 = arith.constant 0 : index
    %3 = vector.load %arg3[%c0_3, %c0_4] : memref<16x512xf32, #tpu.memory_space<vmem>>, vector<16x512xf32>
    tpu.vector_store %arg3[%c0_3, %c0_4], %2 {strides = array<i32>} : memref<16x512xf32, #tpu.memory_space<vmem>>, vector<16x512xf32>,
    return
  }
  func.func @transform_0(%arg0: i32) -> (i32, i32) {
    %c0_i32 = arith.constant 0 : i32
    %c0_i32_0 = arith.constant 0 : i32
    %c0_i32_1 = arith.constant 0 : i32
    return %c0_i32, %c0_i32_0 : i32, i32
  }
  func.func @transform_1(%arg0: i32) -> (i32, i32) {
    %c0_i32 = arith.constant 0 : i32
    %c0_i32_0 = arith.constant 0 : i32
    return %arg0, %c0_i32 : i32, i32
  }
  func.func @transform_2(%arg0: i32) -> (i32, i32) {
    %c0_i32 = arith.constant 0 : i32
    %c0_i32_0 = arith.constant 0 : i32
    return %c0_i32, %arg0 : i32, i32
  }
}

</mosaic_0001>

<llo_original>
// kernel: labeled_matching_forward.1
$region0: #{labeled_matching_forward.1}
  #allocation0 [shape = 'u32[]', space=smem, size = 0x4, offset = 0x4, fixed_abs, tag = 'smem constant byte address 0x4 - core index']
  #allocation1 [shape = 'u32[72,128]{1,0:T(1,128)}', space=vmem, size = 0x9000, scoped, tag = 'internal scratch']
  %s0 = inlined_call_operand.vmem [shape: bf16[16,128], index: 0, kind: input, shape index: {}]
  %s1 = inlined_call_operand.vmem [shape: bf16[512,128], index: 1, kind: input, shape index: {}]
  %s2 = inlined_call_operand.hbm [shape: f32[16,512], index: 2, kind: output, shape index: {}]
  %s3 = sld [smem:[#allocation0]]
  $region18: #{labeled_matching_forward.1} parent=0
    _
  %s5 = ssub.s32 1, %s3
  %s6 = scalar_select 0, %s5, %s3
  $region1: #{labeled_matching_forward.1} parent=0
    #allocation2 [shape = 'u8[32768]{0}', space=vmem, size = 0x8000, scoped, tag = 'output window, operand 0, single buffered']
    #allocation3 [shape = 's32[1]{0}', space=sflag, size = 0x4, scoped, tag = 'scoped memory for labeled_matching_forward.1']
    %7 = vsyncpa [#allocation3], 0
    // Predicated region
    $region2: #{labeled_matching_forward.1} parent=1 // pred_check
      _
    $region3: #{labeled_matching_forward.1} parent=1 // pred_check_branch
      %9 = sbr.rel (0) target = $region5
    $region4: #{labeled_matching_forward.1} parent=1 // pred_region
      _
    $region5: #{labeled_matching_forward.1} parent=1 // pred_fallthru
      _
    // Predicated region
    $region6: #{labeled_matching_forward.1} parent=1 // pred_check
      _
    $region7: #{labeled_matching_forward.1} parent=1 // pred_check_branch
      %11 = sbr.rel (0) target = $region9
    $region8: #{labeled_matching_forward.1} parent=1 // pred_region
      _
    $region9: #{labeled_matching_forward.1} parent=1 // pred_fallthru
      _
    %v12 = vld [vmem:[%s0] sm:$0xf]
    %v13 = vld [vmem:[%s0 + $0x4] sm:$0xf]
    %v14 = vld [vmem:[%s1] sm:$0xf]
    %v15 = vld [vmem:[%s1 + $0x4] sm:$0xf]
    %v16 = vld [vmem:[%s1 + $0x8] sm:$0xf]
    %v17 = vld [vmem:[%s1 + $0xc] sm:$0xf]
    %v18 = vld [vmem:[%s1 + $0x10] sm:$0xf]
    %v19 = vld [vmem:[%s1 + $0x14] sm:$0xf]
    %v20 = vld [vmem:[%s1 + $0x18] sm:$0xf]
    %v21 = vld [vmem:[%s1 + $0x1c] sm:$0xf]
    %v22 = vld [vmem:[%s1 + $0x20] sm:$0xf]
    %v23 = vld [vmem:[%s1 + $0x24] sm:$0xf]
    %v24 = vld [vmem:[%s1 + $0x28] sm:$0xf]
    %v25 = vld [vmem:[%s1 + $0x2c] sm:$0xf]
    %v26 = vld [vmem:[%s1 + $0x30] sm:$0xf]
    %v27 = vld [vmem:[%s1 + $0x34] sm:$0xf]
    %v28 = vld [vmem:[%s1 + $0x38] sm:$0xf]
    %v29 = vld [vmem:[%s1 + $0x3c] sm:$0xf]
    %v30 = vld [vmem:[%s1 + $0x40] sm:$0xf]
    %v31 = vld [vmem:[%s1 + $0x44] sm:$0xf]
    %v32 = vld [vmem:[%s1 + $0x48] sm:$0xf]
    %v33 = vld [vmem:[%s1 + $0x4c] sm:$0xf]
    %v34 = vld [vmem:[%s1 + $0x50] sm:$0xf]
    %v35 = vld [vmem:[%s1 + $0x54] sm:$0xf]
    %v36 = vld [vmem:[%s1 + $0x58] sm:$0xf]
    %v37 = vld [vmem:[%s1 + $0x5c] sm:$0xf]
    %v38 = vld [vmem:[%s1 + $0x60] sm:$0xf]
    %v39 = vld [vmem:[%s1 + $0x64] sm:$0xf]
    %v40 = vld [vmem:[%s1 + $0x68] sm:$0xf]
    %v41 = vld [vmem:[%s1 + $0x6c] sm:$0xf]
    %v42 = vld [vmem:[%s1 + $0x70] sm:$0xf]
    %v43 = vld [vmem:[%s1 + $0x74] sm:$0xf]
    %v44 = vld [vmem:[%s1 + $0x78] sm:$0xf]
    %v45 = vld [vmem:[%s1 + $0x7c] sm:$0xf]
    %v46 = vld [vmem:[%s1 + $0x80] sm:$0xf]
    %v47 = vld [vmem:[%s1 + $0x84] sm:$0xf]
    %v48 = vld [vmem:[%s1 + $0x88] sm:$0xf]
    %v49 = vld [vmem:[%s1 + $0x8c] sm:$0xf]
    %v50 = vld [vmem:[%s1 + $0x90] sm:$0xf]
    %v51 = vld [vmem:[%s1 + $0x94] sm:$0xf]
    %v52 = vld [vmem:[%s1 + $0x98] sm:$0xf]
    %v53 = vld [vmem:[%s1 + $0x9c] sm:$0xf]
    %v54 = vld [vmem:[%s1 + $0xa0] sm:$0xf]
    %v55 = vld [vmem:[%s1 + $0xa4] sm:$0xf]
    %v56 = vld [vmem:[%s1 + $0xa8] sm:$0xf]
    %v57 = vld [vmem:[%s1 + $0xac] sm:$0xf]
    %v58 = vld [vmem:[%s1 + $0xb0] sm:$0xf]
    %v59 = vld [vmem:[%s1 + $0xb4] sm:$0xf]
    %v60 = vld [vmem:[%s1 + $0xb8] sm:$0xf]
    %v61 = vld [vmem:[%s1 + $0xbc] sm:$0xf]
    %v62 = vld [vmem:[%s1 + $0xc0] sm:$0xf]
    %v63 = vld [vmem:[%s1 + $0xc4] sm:$0xf]
    %v64 = vld [vmem:[%s1 + $0xc8] sm:$0xf]
    %v65 = vld [vmem:[%s1 + $0xcc] sm:$0xf]
    %v66 = vld [vmem:[%s1 + $0xd0] sm:$0xf]
    %v67 = vld [vmem:[%s1 + $0xd4] sm:$0xf]
    %v68 = vld [vmem:[%s1 + $0xd8] sm:$0xf]
    %v69 = vld [vmem:[%s1 + $0xdc] sm:$0xf]
    %v70 = vld [vmem:[%s1 + $0xe0] sm:$0xf]
    %v71 = vld [vmem:[%s1 + $0xe4] sm:$0xf]
    %v72 = vld [vmem:[%s1 + $0xe8] sm:$0xf]
    %v73 = vld [vmem:[%s1 + $0xec] sm:$0xf]
    %v74 = vld [vmem:[%s1 + $0xf0] sm:$0xf]
    %v75 = vld [vmem:[%s1 + $0xf4] sm:$0xf]
    %v76 = vld [vmem:[%s1 + $0xf8] sm:$0xf]
    %v77 = vld [vmem:[%s1 + $0xfc] sm:$0xf]
    %v80 = vunpack.c.l.b16 %v12
    %v81 = vunpack.c.l.b16 %v13
    %v82 = vpack.c.b16 %v81, %v80
    %v148 = vunpack.c.l.b16 %v14
    %v149 = vunpack.c.l.b16 %v15
    %v150 = vunpack.c.l.b16 %v16
    %v151 = vunpack.c.l.b16 %v17
    %v152 = vunpack.c.l.b16 %v18
    %v153 = vunpack.c.l.b16 %v19
    %v154 = vunpack.c.l.b16 %v20
    %v155 = vunpack.c.l.b16 %v21
    %v156 = vunpack.c.l.b16 %v22
    %v157 = vunpack.c.l.b16 %v23
    %v158 = vunpack.c.l.b16 %v24
    %v159 = vunpack.c.l.b16 %v25
    %v160 = vunpack.c.l.b16 %v26
    %v161 = vunpack.c.l.b16 %v27
    %v162 = vunpack.c.l.b16 %v28
    %v163 = vunpack.c.l.b16 %v29
    %v164 = vunpack.c.l.b16 %v30
    %v165 = vunpack.c.l.b16 %v31
    %v166 = vunpack.c.l.b16 %v32
    %v167 = vunpack.c.l.b16 %v33
    %v168 = vunpack.c.l.b16 %v34
    %v169 = vunpack.c.l.b16 %v35
    %v170 = vunpack.c.l.b16 %v36
    %v171 = vunpack.c.l.b16 %v37
    %v172 = vunpack.c.l.b16 %v38
    %v173 = vunpack.c.l.b16 %v39
    %v174 = vunpack.c.l.b16 %v40
    %v175 = vunpack.c.l.b16 %v41
    %v176 = vunpack.c.l.b16 %v42
    %v177 = vunpack.c.l.b16 %v43
    %v178 = vunpack.c.l.b16 %v44
    %v179 = vunpack.c.l.b16 %v45
    %v180 = vunpack.c.l.b16 %v46
    %v181 = vunpack.c.l.b16 %v47
    %v182 = vunpack.c.l.b16 %v48
    %v183 = vunpack.c.l.b16 %v49
    %v184 = vunpack.c.l.b16 %v50
    %v185 = vunpack.c.l.b16 %v51
    %v186 = vunpack.c.l.b16 %v52
    %v187 = vunpack.c.l.b16 %v53
    %v188 = vunpack.c.l.b16 %v54
    %v189 = vunpack.c.l.b16 %v55
    %v190 = vunpack.c.l.b16 %v56
    %v191 = vunpack.c.l.b16 %v57
    %v192 = vunpack.c.l.b16 %v58
    %v193 = vunpack.c.l.b16 %v59
    %v194 = vunpack.c.l.b16 %v60
    %v195 = vunpack.c.l.b16 %v61
    %v196 = vunpack.c.l.b16 %v62
    %v197 = vunpack.c.l.b16 %v63
    %v198 = vunpack.c.l.b16 %v64
    %v199 = vunpack.c.l.b16 %v65
    %v200 = vunpack.c.l.b16 %v66
    %v201 = vunpack.c.l.b16 %v67
    %v202 = vunpack.c.l.b16 %v68
    %v203 = vunpack.c.l.b16 %v69
    %v204 = vunpack.c.l.b16 %v70
    %v205 = vunpack.c.l.b16 %v71
    %v206 = vunpack.c.l.b16 %v72
    %v207 = vunpack.c.l.b16 %v73
    %v208 = vunpack.c.l.b16 %v74
    %v209 = vunpack.c.l.b16 %v75
    %v210 = vunpack.c.l.b16 %v76
    %v211 = vunpack.c.l.b16 %v77
    %v212 = vpack.c.b16 %v149, %v148
    %v213 = vpack.c.b16 %v151, %v150
    %v214 = vpack.c.b16 %v153, %v152
    %v215 = vpack.c.b16 %v155, %v154
    %v216 = vpack.c.b16 %v157, %v156
    %v217 = vpack.c.b16 %v159, %v158
    %v218 = vpack.c.b16 %v161, %v160
    %v219 = vpack.c.b16 %v163, %v162
    %v220 = vpack.c.b16 %v165, %v164
    %v221 = vpack.c.b16 %v167, %v166
    %v222 = vpack.c.b16 %v169, %v168
    %v223 = vpack.c.b16 %v171, %v170
    %v224 = vpack.c.b16 %v173, %v172
    %v225 = vpack.c.b16 %v175, %v174
    %v226 = vpack.c.b16 %v177, %v176
    %v227 = vpack.c.b16 %v179, %v178
    %v228 = vpack.c.b16 %v181, %v180
    %v229 = vpack.c.b16 %v183, %v182
    %v230 = vpack.c.b16 %v185, %v184
    %v231 = vpack.c.b16 %v187, %v186
    %v232 = vpack.c.b16 %v189, %v188
    %v233 = vpack.c.b16 %v191, %v190
    %v234 = vpack.c.b16 %v193, %v192
    %v235 = vpack.c.b16 %v195, %v194
    %v236 = vpack.c.b16 %v197, %v196
    %v237 = vpack.c.b16 %v199, %v198
    %v238 = vpack.c.b16 %v201, %v200
    %v239 = vpack.c.b16 %v203, %v202
    %v240 = vpack.c.b16 %v205, %v204
    %v241 = vpack.c.b16 %v207, %v206
    %v242 = vpack.c.b16 %v209, %v208
    %v243 = vpack.c.b16 %v211, %v210
    %276 = vmatpush.bf16.xpose.msra.mxu0 %v219
    %277 = vmatpush.bf16.xpose.msra.mxu0 %v218
    %278 = vmatpush.bf16.xpose.msra.mxu0 %v217
    %279 = vmatpush.bf16.xpose.msra.mxu0 %v216
    %280 = vmatpush.bf16.xpose.msra.mxu0 %v215
    %281 = vmatpush.bf16.xpose.msra.mxu0 %v214
    %282 = vmatpush.bf16.xpose.msra.mxu0 %v213
    %283 = vmatpush.bf16.xpose.msra.mxu0 %v212
    %284 = vmatmul.bf16.gmra.mxu0 %v82
    %v285 = vpop.f32.mrf.mxu0
    %v286 = vadd.f32 0.0, %v285
    %v287 = vpop.f32.mrf.mxu0
    %v288 = vadd.f32 0.0, %v287
    %289 = vdwg.mxu0
    %290 = vmatpush.bf16.xpose.msra.mxu0 %v227
    %291 = vmatpush.bf16.xpose.msra.mxu0 %v226
    %292 = vmatpush.bf16.xpose.msra.mxu0 %v225
    %293 = vmatpush.bf16.xpose.msra.mxu0 %v224
    %294 = vmatpush.bf16.xpose.msra.mxu0 %v223
    %295 = vmatpush.bf16.xpose.msra.mxu0 %v222
    %296 = vmatpush.bf16.xpose.msra.mxu0 %v221
    %297 = vmatpush.bf16.xpose.msra.mxu0 %v220
    %298 = vmatmul.bf16.gmra.mxu0 %v82
    %v299 = vpop.f32.mrf.mxu0
    %v300 = vadd.f32 0.0, %v299
    %v301 = vpop.f32.mrf.mxu0
    %v302 = vadd.f32 0.0, %v301
    %303 = vdwg.mxu0
    %304 = vmatpush.bf16.xpose.msra.mxu0 %v235
    %305 = vmatpush.bf16.xpose.msra.mxu0 %v234
    %306 = vmatpush.bf16.xpose.msra.mxu0 %v233
    %307 = vmatpush.bf16.xpose.msra.mxu0 %v232
    %308 = vmatpush.bf16.xpose.msra.mxu0 %v231
    %309 = vmatpush.bf16.xpose.msra.mxu0 %v230
    %310 = vmatpush.bf16.xpose.msra.mxu0 %v229
    %311 = vmatpush.bf16.xpose.msra.mxu0 %v228
    %312 = vmatmul.bf16.gmra.mxu0 %v82
    %v313 = vpop.f32.mrf.mxu0
    %v314 = vadd.f32 0.0, %v313
    %v315 = vpop.f32.mrf.mxu0
    %v316 = vadd.f32 0.0, %v315
    %317 = vdwg.mxu0
    %318 = vmatpush.bf16.xpose.msra.mxu0 %v243
    %319 = vmatpush.bf16.xpose.msra.mxu0 %v242
    %320 = vmatpush.bf16.xpose.msra.mxu0 %v241
    %321 = vmatpush.bf16.xpose.msra.mxu0 %v240
    %322 = vmatpush.bf16.xpose.msra.mxu0 %v239
    %323 = vmatpush.bf16.xpose.msra.mxu0 %v238
    %324 = vmatpush.bf16.xpose.msra.mxu0 %v237
    %325 = vmatpush.bf16.xpose.msra.mxu0 %v236
    %326 = vmatmul.bf16.gmra.mxu0 %v82
    %v327 = vpop.f32.mrf.mxu0
    %v328 = vadd.f32 0.0, %v327
    %v329 = vpop.f32.mrf.mxu0
    %v330 = vadd.f32 0.0, %v329
    %331 = vdwg.mxu0
    %332 = vst [vmem:[#allocation2] sm:$0xff] %v286
    %333 = vst [vmem:[#allocation2 + $0x8] sm:$0xff] %v300
    %334 = vst [vmem:[#allocation2 + $0x10] sm:$0xff] %v314
    %335 = vst [vmem:[#allocation2 + $0x18] sm:$0xff] %v328
    %336 = vst [vmem:[#allocation2 + $0x20] sm:$0xff] %v288
    %337 = vst [vmem:[#allocation2 + $0x28] sm:$0xff] %v302
    %338 = vst [vmem:[#allocation2 + $0x30] sm:$0xff] %v316
    %339 = vst [vmem:[#allocation2 + $0x38] sm:$0xff] %v330
    // Predicated region
    $region10: #{labeled_matching_forward.1} parent=1 // pred_check
      _
    $region11: #{labeled_matching_forward.1} parent=1 // pred_check_branch
      %341 = sbr.rel (0) target = $region13
    $region12: #{labeled_matching_forward.1} parent=1 // pred_region
      %343 = vsyncadd [#allocation3], 0
      %s344 = sshll.u32 [#allocation2], 4
      %s345 = int_to_ptr.vmem [resolvable:$true] %s344
      %s346 = sshll.u32 %s2, 4
      %s347 = int_to_ptr.hbm [resolvable:$true] %s346
      %352 = dma.vmem_to_hbm [thread:$0]  %s345, 1024, %s347, [#allocation3], 512, 512, 32
    $region13: #{labeled_matching_forward.1} parent=1 // pred_fallthru
      _
    // Predicated region
    $region14: #{labeled_matching_forward.1} parent=1 // pred_check
      _
    $region15: #{labeled_matching_forward.1} parent=1 // pred_check_branch
      %354 = sbr.rel (0) target = $region17
    $region16: #{labeled_matching_forward.1} parent=1 // pred_region
      %356 = dma.done [#allocation3], 1024
    $region17: #{labeled_matching_forward.1} parent=1 // pred_fallthru
      _
    %357 = vsyncpa [#allocation3], 1

</llo_original>
